<compile_context>
chip_gen: v5e
topology: v5e:2x2
jax: 0.10.0
libtpu: 0.0.40
codegen_flags: <defaults>
</compile_context>

<pallas_src>
import functools

import jax
import jax.numpy as jnp
from jax.experimental import pallas as pl
from jax.experimental.pallas import tpu as pltpu

_CDT = jnp.bfloat16   # matmul-operand compute dtype (f32 accumulation everywhere)


def _round_up(x, m):
    return ((x + m - 1) // m) * m


def _pick_ln_tile(total, max_tile=512):
    """Largest multiple of 128 <= max_tile that divides round_up(total, 128)."""
    tp = _round_up(total, 128)
    best, t = 128, 128
    while t <= min(max_tile, tp):
        if tp % t == 0:
            best = t
        t += 128
    return best, tp


def _pick_m_tile(M, max_tile=512):
    M8 = _round_up(M, 8)
    if M8 <= max_tile:
        return M8, M8
    for t in (512, 384, 256, 128):
        Mp = _round_up(M8, t)
        if Mp - M8 <= max(M8 // 8, 8):          # bound padded-row waste
            return t, Mp
    return 128, _round_up(M8, 128)


def _pick_batch_tile(n, max_tile=64):
    """Largest multiple of 8 <= max_tile dividing round_up(n, 8) (zero extra padding)."""
    n8 = _round_up(n, 8)
    t = max_tile
    while t > 8:
        if n8 % t == 0:
            return t
        t -= 8
    return 8


# ---------------------------------------------------------------------------
# Generic tiled matmul + bias (+ optional activation) kernel
# ---------------------------------------------------------------------------

def matmul_kernel(x_ref, w_ref, b_ref, o_ref, acc_ref, *, act):
    @pl.when(pl.program_id(2) == 0)
    def _init():
        acc_ref[...] = jnp.zeros_like(acc_ref)

    acc_ref[...] += jnp.dot(x_ref[...], w_ref[...],
                            preferred_element_type=jnp.float32)

    @pl.when(pl.program_id(2) == pl.num_programs(2) - 1)
    def _fin():
        y = acc_ref[...] + b_ref[...]
        if act == "tanh":
            y = jnp.tanh(y)
        o_ref[...] = y.astype(o_ref.dtype)


def run_matmul(x, w, b, act=None, out_dtype=jnp.float32):
    """y = act(x @ w + b). x:[M,K], w:[K,N], b:[1,N]. Tiled, bf16 operands, f32 acc."""
    M, K = x.shape
    N = w.shape[1]
    tm, Mp = _pick_m_tile(M)
    tk, Kp = _pick_ln_tile(K)
    tn, Np = _pick_ln_tile(N)
    xp = jnp.pad(x, ((0, Mp - M), (0, Kp - K))).astype(_CDT)
    wp = jnp.pad(w, ((0, Kp - K), (0, Np - N))).astype(_CDT)
    bp = jnp.pad(b, ((0, 0), (0, Np - N))).astype(jnp.float32)

    out = pl.pallas_call(
        functools.partial(matmul_kernel, act=act),
        out_shape=jax.ShapeDtypeStruct((Mp, Np), out_dtype),
        grid_spec=pltpu.PrefetchScalarGridSpec(
            num_scalar_prefetch=0,
            grid=(Mp // tm, Np // tn, Kp // tk),
            in_specs=[
                pl.BlockSpec((tm, tk), lambda i, j, k: (i, k)),
                pl.BlockSpec((tk, tn), lambda i, j, k: (k, j)),
                pl.BlockSpec((1, tn), lambda i, j, k: (0, j)),
            ],
            out_specs=pl.BlockSpec((tm, tn), lambda i, j, k: (i, j)),
            scratch_shapes=[pltpu.VMEM((tm, tn), jnp.float32)],
        ),
        compiler_params=pltpu.CompilerParams(
            dimension_semantics=("parallel", "parallel", "arbitrary")),
    )(xp, wp, bp)
    return out[:M, :N]


# ---------------------------------------------------------------------------
# LSTM recurrence (input projection precomputed in bf16; time axis chunked;
# batch axis "parallel", lengths via compare+select)
# ---------------------------------------------------------------------------

def lstm_rec_kernel(xp_ref, len_ref, whh_ref, out_ref, h_scr, c_scr, *, tc, return_seq):
    """Grid = (batch_blocks, time_chunks). One grid step == `tc` timesteps.
    xp_ref: (Bb, tc, 4D) bf16 precomputed x@W_ih + b. len_ref: (Bb, 1) int32 lengths."""
    ci = pl.program_id(1)

    @pl.when(ci == 0)
    def _init():
        h_scr[...] = jnp.zeros_like(h_scr)
        c_scr[...] = jnp.zeros_like(c_scr)

    h = h_scr[...]
    c = c_scr[...]
    d = h.shape[-1]
    whh = whh_ref[...]                                   # (D, 4D) bf16, loaded once/chunk
    # TODO(synk): keep W_hh staged in the MXU across the unrolled timesteps via
    # pltpu.matmul_push_rhs / matmul_acc_lhs / matmul_pop (per-step re-push is the
    # dominant MXU cost of this drain-limited recurrence).
    lens = len_ref[...]                                  # (Bb, 1) int32
    t0 = ci * tc

    for tt in range(tc):                                 # short static inner loop
        xp_t = xp_ref[:, tt, :].astype(jnp.float32)      # bf16 -> f32 at the gate add
        gates = xp_t + jnp.dot(h.astype(_CDT), whh,
                               preferred_element_type=jnp.float32)
        i = jax.nn.sigmoid(gates[:, 0 * d:1 * d])
        f = jax.nn.sigmoid(gates[:, 1 * d:2 * d])
        g = jnp.tanh(gates[:, 2 * d:3 * d])
        o = jax.nn.sigmoid(gates[:, 3 * d:4 * d])
        c_new = f * c + i * g
        h_new = o * jnp.tanh(c_new)
        valid = lens > (t0 + tt)                         # (Bb, 1) bool; freezes padded steps
        c = jnp.where(valid, c_new, c)
        h = jnp.where(valid, h_new, h)
        if return_seq:
            out_ref[:, tt, :] = h

    h_scr[...] = h
    c_scr[...] = c
    if not return_seq:
        @pl.when(ci == pl.num_programs(1) - 1)
        def _fin():
            out_ref[...] = h                             # single writeback at the end


def run_lstm(x, w_ih, w_hh, b, lengths=None, return_seq=False):
    """x: [N, T, Din] batch-major. Returns final hidden [N, D] or full sequence [N, T, D]."""
    N, T, Din = x.shape
    D = w_hh.shape[0]
    Tc = 8
    T_pad = _round_up(T, Tc)
    Bb = _pick_batch_tile(N)
    Np = _round_up(N, Bb)

    # Hoisted input projection: one big MXU matmul over all (row, timestep) pairs; bf16 out.
    x_p = jnp.pad(x, ((0, Np - N), (0, T_pad - T), (0, 0)))
    xp = run_matmul(x_p.reshape(Np * T_pad, Din), w_ih, b,
                    out_dtype=_CDT).reshape(Np, T_pad, 4 * D)

    if lengths is None:
        lengths = jnp.full((N,), T, jnp.int32)
    lengths = jnp.pad(jnp.asarray(lengths, jnp.int32), (0, Np - N))
    len_col = lengths[:, None]                           # (Np, 1) int32

    whh = w_hh.astype(_CDT)

    if return_seq:
        out_shape = jax.ShapeDtypeStruct((Np, T_pad, D), jnp.float32)
        out_spec = pl.BlockSpec((Bb, Tc, D), lambda bi, ci: (bi, ci, 0))
    else:
        out_shape = jax.ShapeDtypeStruct((Np, D), jnp.float32)
        out_spec = pl.BlockSpec((Bb, D), lambda bi, ci: (bi, 0))

    out = pl.pallas_call(
        functools.partial(lstm_rec_kernel, tc=Tc, return_seq=return_seq),
        out_shape=out_shape,
        grid_spec=pltpu.PrefetchScalarGridSpec(
            num_scalar_prefetch=0,
            grid=(Np // Bb, T_pad // Tc),
            in_specs=[
                pl.BlockSpec((Bb, Tc, 4 * D), lambda bi, ci: (bi, ci, 0)),
                pl.BlockSpec((Bb, 1), lambda bi, ci: (bi, 0)),
                pl.BlockSpec((D, 4 * D), lambda bi, ci: (0, 0)),
            ],
            out_specs=out_spec,
            scratch_shapes=[pltpu.VMEM((Bb, D), jnp.float32),
                            pltpu.VMEM((Bb, D), jnp.float32)],
        ),
        compiler_params=pltpu.CompilerParams(
            dimension_semantics=("parallel", "arbitrary")),
    )(xp, len_col, whh)

    if return_seq:
        return out[:N, :T, :]
    return out[:N, :]


# ---------------------------------------------------------------------------
# MAC reasoning kernel (concatenated knowledge bases, VPU/XLU attention,
# batch axis "parallel", step axis "arbitrary")
# ---------------------------------------------------------------------------

def mac_kernel(q_ref, k_ref, wctrl_ref, bctrl_ref, wm1_ref, wm2_ref, bm_ref,
               mem_out_ref, mem_scr, *, seg_sizes):
    """Grid = (batch_blocks, max_step). Memory carried in VMEM scratch per batch block."""
    s = pl.program_id(1)

    @pl.when(s == 0)
    def _init():
        mem_scr[...] = q_ref[...]

    q = q_ref[...]
    mem = mem_scr[...]
    ctrl_in = (q * mem).astype(_CDT)
    ctrl = jnp.tanh(jnp.dot(ctrl_in, wctrl_ref[...],
                            preferred_element_type=jnp.float32) + bctrl_ref[...])

    k = k_ref[...]                                        # (Bb, T_tot, D) bf16
    # q-dim is 1 -> attention on VPU multiply + reduce (MXU would be fill/drain dominated).
    scores = jnp.sum(ctrl[:, None, :] * k, axis=-1)       # (Bb, T_tot) f32

    atts = []
    off = 0
    for ts in seg_sizes:                                  # per-RU softmax, static lane slices
        sc = scores[:, off:off + ts]
        m = jnp.max(sc, axis=-1, keepdims=True)
        e = jnp.exp(sc - m)
        inv = pl.reciprocal(jnp.sum(e, axis=-1, keepdims=True), approx=True)
        atts.append(e * inv)
        off += ts
    att = jnp.concatenate(atts, axis=-1)                  # (Bb, T_tot)
    # info == sum of the three per-RU reads == att_cat applied to k_cat.
    info = jnp.sum(att[:, :, None] * k, axis=1)           # (Bb, D) f32

    mem_new = jnp.tanh(
        jnp.dot(mem.astype(_CDT), wm1_ref[...], preferred_element_type=jnp.float32)
        + jnp.dot(info.astype(_CDT), wm2_ref[...], preferred_element_type=jnp.float32)
        + bm_ref[...])
    mem_scr[...] = mem_new

    @pl.when(s == pl.num_programs(1) - 1)
    def _fin():
        mem_out_ref[...] = mem_new


def run_mac(q_rep, k_sub, k_vis, k_ac, wctrl, bctrl, wm1, wm2, bm, max_step):
    B, D = q_rep.shape
    seg_sizes = (k_sub.shape[1], k_vis.shape[1], k_ac.shape[1])
    k_cat = jnp.concatenate([k_sub, k_vis, k_ac], axis=1).astype(_CDT)   # (B, T_tot, D)
    T_tot = k_cat.shape[1]

    Bb = _pick_batch_tile(B)
    Bp = _round_up(B, Bb)
    q_p = jnp.pad(q_rep, ((0, Bp - B), (0, 0)))
    k_p = jnp.pad(k_cat, ((0, Bp - B), (0, 0), (0, 0)))
    wctrl_, wm1_, wm2_ = (a.astype(_CDT) for a in (wctrl, wm1, wm2))

    # TODO(synk): at production B/T on v7x, T-tile the (Bb, T_tot, D) KB block or use
    # pipeline_mode=pl.Buffered(1) on constant-index inputs to stay inside 64 MiB VMEM.
    out = pl.pallas_call(
        functools.partial(mac_kernel, seg_sizes=seg_sizes),
        out_shape=jax.ShapeDtypeStruct((Bp, D), jnp.float32),
        grid_spec=pltpu.PrefetchScalarGridSpec(
            num_scalar_prefetch=0,
            grid=(Bp // Bb, max_step),
            in_specs=[
                pl.BlockSpec((Bb, D), lambda bi, s: (bi, 0)),
                pl.BlockSpec((Bb, T_tot, D), lambda bi, s: (bi, 0, 0)),
                pl.BlockSpec((D, D), lambda bi, s: (0, 0)),
                pl.BlockSpec((1, D), lambda bi, s: (0, 0)),
                pl.BlockSpec((D, D), lambda bi, s: (0, 0)),
                pl.BlockSpec((D, D), lambda bi, s: (0, 0)),
                pl.BlockSpec((1, D), lambda bi, s: (0, 0)),
            ],
            out_specs=pl.BlockSpec((Bb, D), lambda bi, s: (bi, 0)),
            scratch_shapes=[pltpu.VMEM((Bb, D), jnp.float32)],     # memory state
        ),
        compiler_params=pltpu.CompilerParams(
            dimension_semantics=("parallel", "arbitrary")),
    )(q_p, k_p, wctrl_, bctrl, wm1_, wm2_, bm)
    return out[:B]


# ---------------------------------------------------------------------------
# Fused per-answer classifier: concat-K hidden matmul + VPU output projection
# ---------------------------------------------------------------------------

def classifier_kernel(x_ref, w_ref, bh_ref, wo_ref, bo_ref, out_ref):
    h = jnp.dot(x_ref[...], w_ref[...],
                preferred_element_type=jnp.float32) + bh_ref[...]
    h = jnp.where(h > 0, h, jnp.expm1(jnp.minimum(h, 0.0)))          # ELU (expm1 branch)
    # Final H->1 projection on the VPU + lane reduce (avoids an N=1 MXU matmul).
    out_ref[...] = jnp.sum(h * wo_ref[...], axis=-1, keepdims=True) + bo_ref[...]


def run_classifier(mem_rep, q_rep_rep, ans_flat, whm, whq, wha, bh, wo, bo):
    M, D = mem_rep.shape
    Mp = _round_up(M, 8)
    xcat = jnp.concatenate([mem_rep, q_rep_rep, ans_flat], axis=1)    # (M, 3D)
    xcat = jnp.pad(xcat, ((0, Mp - M), (0, 0))).astype(_CDT)
    w_stack = jnp.concatenate([whm, whq, wha], axis=0).astype(_CDT)   # (3D, H)
    wo_row = wo.reshape(1, -1).astype(jnp.float32)                    # (1, H)

    vmem = pl.BlockSpec(memory_space=pltpu.MemorySpace.VMEM)
    # TODO(synk): a lane-dense (1, Mp) output layout would avoid the 1-lane masked store.
    out = pl.pallas_call(
        classifier_kernel,
        out_shape=jax.ShapeDtypeStruct((Mp, 1), jnp.float32),
        in_specs=[vmem, vmem, vmem, vmem, vmem],
        out_specs=vmem,
    )(xcat, w_stack, bh, wo_row, bo)
    return out[:M]                                                    # [B*classes, 1]


# ---------------------------------------------------------------------------
# Model wrapper (mirrors LSTM_QAVTAc_MAC.forward in eval mode)
# ---------------------------------------------------------------------------

def init_params(key, *, word_dim, sub_dim, vis_dim, ac_dim, dim, hidden):
    ks = jax.random.split(key, 20)
    s = 0.02
    n = lambda i, shape: (s * jax.random.normal(ks[i], shape)).astype(jnp.float32)
    return {
        # question / answer LSTM (shared word space); bias = b_ih + b_hh pre-summed
        "q_wih": n(0, (word_dim, 4 * dim)), "q_whh": n(1, (dim, 4 * dim)),
        "q_b": jnp.zeros((1, 4 * dim), jnp.float32),
        # transcript (subs) LSTM
        "s_wih": n(2, (sub_dim, 4 * dim)), "s_whh": n(3, (dim, 4 * dim)),
        "s_b": jnp.zeros((1, 4 * dim), jnp.float32),
        # visual / acoustic projections
        "v_w": n(4, (vis_dim, dim)), "v_b": jnp.zeros((1, dim), jnp.float32),
        "a_w": n(5, (ac_dim, dim)), "a_b": jnp.zeros((1, dim), jnp.float32),
        # MAC reasoning
        "wctrl": n(6, (dim, dim)), "bctrl": jnp.zeros((1, dim), jnp.float32),
        "wm1": n(7, (dim, dim)), "wm2": n(8, (dim, dim)),
        "bm": jnp.zeros((1, dim), jnp.float32),
        # classifier
        "whm": n(9, (dim, hidden)), "whq": n(10, (dim, hidden)),
        "wha": n(11, (dim, hidden)), "bh": jnp.zeros((1, hidden), jnp.float32),
        "wo": n(12, (hidden, 1)), "bo": jnp.zeros((1, 1), jnp.float32),
    }


class LSTMQAVTAcMACPallas:
    """Eval-mode forward of LSTM_QAVTAc_MAC.

    `accumulate(mac_running, mac, 0)` makes mac_running an exact copy of mac at init,
    and MODE == 'eval' routes the forward through mac_running, so a single parameter
    set suffices."""

    def __init__(self, params, max_step):
        self.p = params
        self.max_step = max_step

    def __call__(self, q, answers, subs, vis, ac):
        p = self.p
        B, Tq, Wd = q.shape
        _, classes, Ta, _ = answers.shape
        D = p["q_whh"].shape[0]

        # --- merged question + answer encoder (shared LSTM, one call, length-masked) ---
        Tm = max(Tq, Ta)
        q_pad = jnp.pad(q, ((0, 0), (0, Tm - Tq), (0, 0)))
        a_flat = answers.reshape(B * classes, Ta, Wd)
        a_pad = jnp.pad(a_flat, ((0, 0), (0, Tm - Ta), (0, 0)))
        qa = jnp.concatenate([q_pad, a_pad], axis=0)              # [B*(1+classes), Tm, Wd]
        lengths = jnp.concatenate([jnp.full((B,), Tq, jnp.int32),
                                   jnp.full((B * classes,), Ta, jnp.int32)])
        h_last = run_lstm(qa, p["q_wih"], p["q_whh"], p["q_b"],
                          lengths=lengths, return_seq=False)      # [B*(1+classes), D]
        q_rep = h_last[:B]                                        # [B, D]
        ans_flat_enc = h_last[B:]                                 # [B*classes, D]

        # --- transcript (subs) knowledge base: full hidden sequence, batch-major ---
        k_sub = run_lstm(subs, p["s_wih"], p["s_whh"], p["s_b"],
                         return_seq=True)                         # [B, Ts, D]

        # --- visual / acoustic knowledge bases (tiled projections + tanh) ---
        Bv, Tv, Vd = vis.shape
        k_vis = run_matmul(vis.reshape(Bv * Tv, Vd), p["v_w"], p["v_b"],
                           act="tanh").reshape(B, Tv, D)
        Ba, Tac, Ad = ac.shape
        k_ac = run_matmul(ac.reshape(Ba * Tac, Ad), p["a_w"], p["a_b"],
                          act="tanh").reshape(B, Tac, D)

        # --- MAC reasoning over the 3 RUs (concatenated along T inside run_mac) ---
        memory = run_mac(q_rep, k_sub, k_vis, k_ac,
                         p["wctrl"], p["bctrl"], p["wm1"], p["wm2"], p["bm"],
                         self.max_step)                           # [B, D]

        # --- fused per-answer classifier ---
        mem_rep = jnp.repeat(memory, classes, axis=0)             # [B*classes, D]
        q_rep_rep = jnp.repeat(q_rep, classes, axis=0)            # [B*classes, D]
        logits_col = run_classifier(mem_rep, q_rep_rep, ans_flat_enc,
                                    p["whm"], p["whq"], p["wha"], p["bh"],
                                    p["wo"], p["bo"])             # [B*classes, 1]
        logits = logits_col.reshape(B, classes)

        # same as: [logits[:, i].unsqueeze(-1) for i in range(logits.shape[1])]
        return [logits[:, i][:, None] for i in range(classes)]


# ---------------------------------------------------------------------------
# Demo
# ---------------------------------------------------------------------------

if __name__ == "__main__":
    # Small stand-ins for (visual_dim=2208, ac_dim=74, dim=512) of the original module.
    B, CLASSES, MAX_STEP = 2, 2, 3
    WORD_DIM, SUB_DIM, VIS_DIM, AC_DIM = 128, 128, 256, 64
    DIM, HIDDEN = 128, 128
    TQ, TA, TS, TV, TAC = 8, 6, 8, 8, 8

    key = jax.random.PRNGKey(0)
    k_par, kq, ka, ks, kv, kc = jax.random.split(key, 6)

    params = init_params(k_par, word_dim=WORD_DIM, sub_dim=SUB_DIM,
                         vis_dim=VIS_DIM, ac_dim=AC_DIM, dim=DIM, hidden=HIDDEN)
    model = LSTMQAVTAcMACPallas(params, MAX_STEP)

    q = jax.random.normal(kq, (B, TQ, WORD_DIM), jnp.float32)
    answers = jax.random.normal(ka, (B, CLASSES, TA, WORD_DIM), jnp.float32)
    subs = jax.random.normal(ks, (B, TS, SUB_DIM), jnp.float32)
    vis = jax.random.normal(kv, (B, TV, VIS_DIM), jnp.float32)
    ac = jax.random.normal(kc, (B, TAC, AC_DIM), jnp.float32)

    outs = model(q, answers, subs, vis, ac)
    outs = [jax.block_until_ready(o) for o in outs]
    assert len(outs) == CLASSES and all(o.shape == (B, 1) for o in outs)
    assert all(bool(jnp.all(jnp.isfinite(o))) for o in outs)
    print("KERNEL_OK")
</pallas_src>

<mosaic_0001>
module attributes {stable_mosaic.version = 11 : i64} {
  func.func @matmul_kernel(%arg0: i32, %arg1: i32, %arg2: i32, %arg3: memref<64x128xbf16, #tpu.memory_space<vmem>>, %arg4: memref<128x512xbf16, #tpu.memory_space<vmem>>, %arg5: memref<1x512xf32, #tpu.memory_space<vmem>>, %arg6: memref<64x512xbf16, #tpu.memory_space<vmem>>, %arg7: memref<64x512xf32, #tpu.memory_space<vmem>>) attributes {dimension_semantics = [#tpu.dimension_semantics<parallel>, #tpu.dimension_semantics<parallel>, #tpu.dimension_semantics<arbitrary>], iteration_bounds = array<i64: 1, 1, 1>, scalar_prefetch = 0 : i64, scratch_operands = 1 : i64, tpu.core_type = #tpu.core_type<tc>, window_params = [{transform_indices = @transform_0, window_bounds = array<i64: 64, 128>}, {transform_indices = @transform_1, window_bounds = array<i64: 128, 512>}, {transform_indices = @transform_2, window_bounds = array<i64: 1, 512>}, {transform_indices = @transform_3, window_bounds = array<i64: 64, 512>}]} {
    %c0_i32 = arith.constant 0 : i32
    %0 = arith.cmpi eq, %arg2, %c0_i32 : i32
    %1 = arith.extui %0 : i1 to i32
    %c0_i32_0 = arith.constant 0 : i32
    %2 = arith.cmpi ne, %1, %c0_i32_0 : i32
    scf.if %2 {
      %cst_10 = arith.constant 0.000000e+00 : f32
      %12 = vector.broadcast %cst_10 : f32 to vector<64x512xf32>
      %c0_11 = arith.constant 0 : index
      %c0_12 = arith.constant 0 : index
      %13 = vector.load %arg7[%c0_11, %c0_12] : memref<64x512xf32, #tpu.memory_space<vmem>>, vector<64x512xf32>
      tpu.vector_store %arg7[%c0_11, %c0_12], %12 {strides = array<i32>} : memref<64x512xf32, #tpu.memory_space<vmem>>, vector<64x512xf32>,
    } else {
    }
    %c0 = arith.constant 0 : index
    %c0_1 = arith.constant 0 : index
    %3 = vector.load %arg7[%c0, %c0_1] : memref<64x512xf32, #tpu.memory_space<vmem>>, vector<64x512xf32>
    %c0_2 = arith.constant 0 : index
    %c0_3 = arith.constant 0 : index
    %4 = vector.load %arg3[%c0_2, %c0_3] : memref<64x128xbf16, #tpu.memory_space<vmem>>, vector<64x128xbf16>
    %c0_4 = arith.constant 0 : index
    %c0_5 = arith.constant 0 : index
    %5 = vector.load %arg4[%c0_4, %c0_5] : memref<128x512xbf16, #tpu.memory_space<vmem>>, vector<128x512xbf16>
    %cst = arith.constant dense<0.000000e+00> : vector<64x512xf32>
    %6 = tpu.matmul %4, %5, %cst {dimension_numbers = #tpu.dot_dimension_numbers<[1], [0], [0], [1], [0, 0, 1, 1], [], []>} : vector<64x128xbf16>, vector<128x512xbf16>, vector<64x512xf32> -> vector<64x512xf32>
    %7 = arith.addf %3, %6 : vector<64x512xf32>
    %c0_6 = arith.constant 0 : index
    %c0_7 = arith.constant 0 : index
    %8 = vector.load %arg7[%c0_6, %c0_7] : memref<64x512xf32, #tpu.memory_space<vmem>>, vector<64x512xf32>
    tpu.vector_store %arg7[%c0_6, %c0_7], %7 {strides = array<i32>} : memref<64x512xf32, #tpu.memory_space<vmem>>, vector<64x512xf32>,
    %c0_i32_8 = arith.constant 0 : i32
    %9 = arith.cmpi eq, %arg2, %c0_i32_8 : i32
    %10 = arith.extui %9 : i1 to i32
    %c0_i32_9 = arith.constant 0 : i32
    %11 = arith.cmpi ne, %10, %c0_i32_9 : i32
    scf.if %11 {
      %c0_10 = arith.constant 0 : index
      %c0_11 = arith.constant 0 : index
      %12 = vector.load %arg7[%c0_10, %c0_11] : memref<64x512xf32, #tpu.memory_space<vmem>>, vector<64x512xf32>
      %c0_12 = arith.constant 0 : index
      %c0_13 = arith.constant 0 : index
      %13 = vector.load %arg5[%c0_12, %c0_13] : memref<1x512xf32, #tpu.memory_space<vmem>>, vector<1x512xf32>
      %14 = vector.broadcast %13 : vector<1x512xf32> to vector<64x512xf32>
      %15 = arith.addf %12, %14 : vector<64x512xf32>
      %16 = arith.truncf %15 : vector<64x512xf32> to vector<64x512xbf16>
      %c0_14 = arith.constant 0 : index
      %c0_15 = arith.constant 0 : index
      %17 = vector.load %arg6[%c0_14, %c0_15] : memref<64x512xbf16, #tpu.memory_space<vmem>>, vector<64x512xbf16>
      tpu.vector_store %arg6[%c0_14, %c0_15], %16 {strides = array<i32>} : memref<64x512xbf16, #tpu.memory_space<vmem>>, vector<64x512xbf16>,
    } else {
    }
    return
  }
  func.func @transform_0(%arg0: i32, %arg1: i32, %arg2: i32) -> (i32, i32) {
    %c0_i32 = arith.constant 0 : i32
    return %arg0, %arg2 : i32, i32
  }
  func.func @transform_1(%arg0: i32, %arg1: i32, %arg2: i32) -> (i32, i32) {
    %c0_i32 = arith.constant 0 : i32
    return %arg2, %arg1 : i32, i32
  }
  func.func @transform_2(%arg0: i32, %arg1: i32, %arg2: i32) -> (i32, i32) {
    %c0_i32 = arith.constant 0 : i32
    %c0_i32_0 = arith.constant 0 : i32
    return %c0_i32, %arg1 : i32, i32
  }
  func.func @transform_3(%arg0: i32, %arg1: i32, %arg2: i32) -> (i32, i32) {
    %c0_i32 = arith.constant 0 : i32
    return %arg0, %arg1 : i32, i32
  }
}

</mosaic_0001>

<llo_original>
// kernel: tpu_custom_call.1
$region0: #{tpu_custom_call.1}
  #allocation0 [shape = 'u32[]', space=smem, size = 0x4, offset = 0x4, fixed_abs, tag = 'smem constant byte address 0x4 - core index']
  #allocation1 [shape = 'u32[72,128]{1,0:T(1,128)}', space=vmem, size = 0x9000, scoped, tag = 'internal scratch']
  #allocation2 [shape = 'f32[64,512]{1,0:T(8,128)}', space=vmem, size = 0x20000, scoped, tag = 'scratch operand']
  %s0 = inlined_call_operand.hbm [shape: bf16[64,128], index: 0, kind: input, shape index: {}]
  %s1 = inlined_call_operand.hbm [shape: bf16[128,512], index: 1, kind: input, shape index: {}]
  %s2 = inlined_call_operand.hbm [shape: f32[1,512], index: 2, kind: input, shape index: {}]
  %s3 = inlined_call_operand.hbm [shape: bf16[64,512], index: 3, kind: output, shape index: {}]
  %s4 = sld [smem:[#allocation0]]
  $region42: #{tpu_custom_call.1} parent=0
    _
  %s6 = ssub.s32 1, %s4
  %s7 = scalar_select 0, %s6, %s4
  $region1: #{tpu_custom_call.1} parent=0
    #allocation3 [shape = 'u8[16384]{0}', space=vmem, size = 0x4000, scoped, tag = 'input window, operand 0, single buffered']
    #allocation4 [shape = 's32[1]{0}', space=sflag, size = 0x4, scoped, tag = 'scoped memory for tpu_custom_call.1']
    #allocation5 [shape = 's32[1]{0}', space=sflag, size = 0x4, scoped, tag = 'scoped memory for tpu_custom_call.1']
    #allocation6 [shape = 'u8[131072]{0}', space=vmem, size = 0x20000, scoped, tag = 'input window, operand 1, single buffered']
    #allocation7 [shape = 's32[1]{0}', space=sflag, size = 0x4, scoped, tag = 'scoped memory for tpu_custom_call.1']
    #allocation8 [shape = 'u8[2048]{0}', space=vmem, size = 0x800, scoped, tag = 'input window, operand 2, single buffered']
    #allocation9 [shape = 'u8[65536]{0}', space=vmem, size = 0x10000, scoped, tag = 'output window, operand 0, single buffered']
    %8 = vsyncpa [#allocation4], 0
    %9 = vsyncpa [#allocation7], 0
    %10 = vsyncpa [#allocation5], 0
    // Predicated region
    $region2: #{tpu_custom_call.1} parent=1 // pred_check
      _
    $region3: #{tpu_custom_call.1} parent=1 // pred_check_branch
      %12 = sbr.rel (0) target = $region5
    $region4: #{tpu_custom_call.1} parent=1 // pred_region
      %14 = vsyncadd [#allocation4], 0
      %s15 = sshll.u32 %s0, 4
      %s16 = int_to_ptr.hbm [resolvable:$true] %s15
      %s17 = sshll.u32 [#allocation3], 4
      %s18 = int_to_ptr.vmem [resolvable:$true] %s17
      %23 = dma.hbm_to_vmem [thread:$0]  %s16, 512, %s18, [#allocation4], 64, 64, 4
    $region5: #{tpu_custom_call.1} parent=1 // pred_fallthru
      _
    // Predicated region
    $region6: #{tpu_custom_call.1} parent=1 // pred_check
      _
    $region7: #{tpu_custom_call.1} parent=1 // pred_check_branch
      %25 = sbr.rel (0) target = $region9
    $region8: #{tpu_custom_call.1} parent=1 // pred_region
      %27 = vsyncadd [#allocation7], 0
      %s28 = sshll.u32 %s1, 4
      %s29 = int_to_ptr.hbm [resolvable:$true] %s28
      %s30 = sshll.u32 [#allocation6], 4
      %s31 = int_to_ptr.vmem [resolvable:$true] %s30
      %36 = dma.hbm_to_vmem [thread:$0]  %s29, 4096, %s31, [#allocation7], 256, 256, 16
    $region9: #{tpu_custom_call.1} parent=1 // pred_fallthru
      _
    // Predicated region
    $region10: #{tpu_custom_call.1} parent=1 // pred_check
      _
    $region11: #{tpu_custom_call.1} parent=1 // pred_check_branch
      %38 = sbr.rel (0) target = $region13
    $region12: #{tpu_custom_call.1} parent=1 // pred_region
      %40 = vsyncadd [#allocation7], 0
      %s42 = sshll.u32 %s2, 4
      %s43 = int_to_ptr.hbm [resolvable:$true] %s42
      %s44 = sshll.u32 [#allocation8], 4
      %s45 = int_to_ptr.vmem [resolvable:$true] %s44
      %47 = dma.hbm_to_vmem [thread:$0]  %s43, 64, %s45, [#allocation7]
    $region13: #{tpu_custom_call.1} parent=1 // pred_fallthru
      _
    // Predicated region
    $region14: #{tpu_custom_call.1} parent=1 // pred_check
      _
    $region15: #{tpu_custom_call.1} parent=1 // pred_check_branch
      %49 = sbr.rel (0) target = $region17
    $region16: #{tpu_custom_call.1} parent=1 // pred_region
      %51 = dma.done [#allocation4], 512
    $region17: #{tpu_custom_call.1} parent=1 // pred_fallthru
      _
    // Predicated region
    $region18: #{tpu_custom_call.1} parent=1 // pred_check
      _
    $region19: #{tpu_custom_call.1} parent=1 // pred_check_branch
      %53 = sbr.rel (0) target = $region21
    $region20: #{tpu_custom_call.1} parent=1 // pred_region
      %55 = dma.done [#allocation7], 4096
    $region21: #{tpu_custom_call.1} parent=1 // pred_fallthru
      _
    // Predicated region
    $region22: #{tpu_custom_call.1} parent=1 // pred_check
      _
    $region23: #{tpu_custom_call.1} parent=1 // pred_check_branch
      %57 = sbr.rel (0) target = $region25
    $region24: #{tpu_custom_call.1} parent=1 // pred_region
      %59 = dma.done [#allocation7], 64
    $region25: #{tpu_custom_call.1} parent=1 // pred_fallthru
      _
    %p60 = scmp.eq.s32.totalorder 0, 0
    // Predicated region
    $region26: #{tpu_custom_call.1} parent=1 // pred_check
      %p61 = pneg %p60
    $region27: #{tpu_custom_call.1} parent=1 // pred_check_branch
      %63 = sbr.rel (%p61) target = $region29
    $region28: #{tpu_custom_call.1} parent=1 // pred_region
      %64 = vst [vmem:[#allocation2] sm:$0xff] 0.0
      %65 = vst [vmem:[#allocation2 + $0x8] sm:$0xff] 0.0
      %66 = vst [vmem:[#allocation2 + $0x10] sm:$0xff] 0.0
      %67 = vst [vmem:[#allocation2 + $0x18] sm:$0xff] 0.0
      %68 = vst [vmem:[#allocation2 + $0x20] sm:$0xff] 0.0
      %69 = vst [vmem:[#allocation2 + $0x28] sm:$0xff] 0.0
      %70 = vst [vmem:[#allocation2 + $0x30] sm:$0xff] 0.0
      %71 = vst [vmem:[#allocation2 + $0x38] sm:$0xff] 0.0
      %72 = vst [vmem:[#allocation2 + $0x40] sm:$0xff] 0.0
      %73 = vst [vmem:[#allocation2 + $0x48] sm:$0xff] 0.0
      %74 = vst [vmem:[#allocation2 + $0x50] sm:$0xff] 0.0
      %75 = vst [vmem:[#allocation2 + $0x58] sm:$0xff] 0.0
      %76 = vst [vmem:[#allocation2 + $0x60] sm:$0xff] 0.0
      %77 = vst [vmem:[#allocation2 + $0x68] sm:$0xff] 0.0
      %78 = vst [vmem:[#allocation2 + $0x70] sm:$0xff] 0.0
      %79 = vst [vmem:[#allocation2 + $0x78] sm:$0xff] 0.0
      %80 = vst [vmem:[#allocation2 + $0x80] sm:$0xff] 0.0
      %81 = vst [vmem:[#allocation2 + $0x88] sm:$0xff] 0.0
      %82 = vst [vmem:[#allocation2 + $0x90] sm:$0xff] 0.0
      %83 = vst [vmem:[#allocation2 + $0x98] sm:$0xff] 0.0
      %84 = vst [vmem:[#allocation2 + $0xa0] sm:$0xff] 0.0
      %85 = vst [vmem:[#allocation2 + $0xa8] sm:$0xff] 0.0
      %86 = vst [vmem:[#allocation2 + $0xb0] sm:$0xff] 0.0
      %87 = vst [vmem:[#allocation2 + $0xb8] sm:$0xff] 0.0
      %88 = vst [vmem:[#allocation2 + $0xc0] sm:$0xff] 0.0
      %89 = vst [vmem:[#allocation2 + $0xc8] sm:$0xff] 0.0
      %90 = vst [vmem:[#allocation2 + $0xd0] sm:$0xff] 0.0
      %91 = vst [vmem:[#allocation2 + $0xd8] sm:$0xff] 0.0
      %92 = vst [vmem:[#allocation2 + $0xe0] sm:$0xff] 0.0
      %93 = vst [vmem:[#allocation2 + $0xe8] sm:$0xff] 0.0
      %94 = vst [vmem:[#allocation2 + $0xf0] sm:$0xff] 0.0
      %95 = vst [vmem:[#allocation2 + $0xf8] sm:$0xff] 0.0
    $region29: #{tpu_custom_call.1} parent=1 // pred_fallthru
      _
    %v96 = vld [vmem:[#allocation2] sm:$0xff]
    %v97 = vld [vmem:[#allocation2 + $0x8] sm:$0xff]
    %v98 = vld [vmem:[#allocation2 + $0x10] sm:$0xff]
    %v99 = vld [vmem:[#allocation2 + $0x18] sm:$0xff]
    %v100 = vld [vmem:[#allocation2 + $0x20] sm:$0xff]
    %v101 = vld [vmem:[#allocation2 + $0x28] sm:$0xff]
    %v102 = vld [vmem:[#allocation2 + $0x30] sm:$0xff]
    %v103 = vld [vmem:[#allocation2 + $0x38] sm:$0xff]
    %v104 = vld [vmem:[#allocation2 + $0x40] sm:$0xff]
    %v105 = vld [vmem:[#allocation2 + $0x48] sm:$0xff]
    %v106 = vld [vmem:[#allocation2 + $0x50] sm:$0xff]
    %v107 = vld [vmem:[#allocation2 + $0x58] sm:$0xff]
    %v108 = vld [vmem:[#allocation2 + $0x60] sm:$0xff]
    %v109 = vld [vmem:[#allocation2 + $0x68] sm:$0xff]
    %v110 = vld [vmem:[#allocation2 + $0x70] sm:$0xff]
    %v111 = vld [vmem:[#allocation2 + $0x78] sm:$0xff]
    %v112 = vld [vmem:[#allocation2 + $0x80] sm:$0xff]
    %v113 = vld [vmem:[#allocation2 + $0x88] sm:$0xff]
    %v114 = vld [vmem:[#allocation2 + $0x90] sm:$0xff]
    %v115 = vld [vmem:[#allocation2 + $0x98] sm:$0xff]
    %v116 = vld [vmem:[#allocation2 + $0xa0] sm:$0xff]
    %v117 = vld [vmem:[#allocation2 + $0xa8] sm:$0xff]
    %v118 = vld [vmem:[#allocation2 + $0xb0] sm:$0xff]
    %v119 = vld [vmem:[#allocation2 + $0xb8] sm:$0xff]
    %v120 = vld [vmem:[#allocation2 + $0xc0] sm:$0xff]
    %v121 = vld [vmem:[#allocation2 + $0xc8] sm:$0xff]
    %v122 = vld [vmem:[#allocation2 + $0xd0] sm:$0xff]
    %v123 = vld [vmem:[#allocation2 + $0xd8] sm:$0xff]
    %v124 = vld [vmem:[#allocation2 + $0xe0] sm:$0xff]
    %v125 = vld [vmem:[#allocation2 + $0xe8] sm:$0xff]
    %v126 = vld [vmem:[#allocation2 + $0xf0] sm:$0xff]
    %v127 = vld [vmem:[#allocation2 + $0xf8] sm:$0xff]
    %v128 = vld [vmem:[#allocation3] sm:$0xf]
    %v129 = vld [vmem:[#allocation3 + $0x4] sm:$0xf]
    %v130 = vld [vmem:[#allocation3 + $0x8] sm:$0xf]
    %v131 = vld [vmem:[#allocation3 + $0xc] sm:$0xf]
    %v132 = vld [vmem:[#allocation3 + $0x10] sm:$0xf]
    %v133 = vld [vmem:[#allocation3 + $0x14] sm:$0xf]
    %v134 = vld [vmem:[#allocation3 + $0x18] sm:$0xf]
    %v135 = vld [vmem:[#allocation3 + $0x1c] sm:$0xf]
    %v136 = vld [vmem:[#allocation6] sm:$0xff]
    %v137 = vld [vmem:[#allocation6 + $0x8] sm:$0xff]
    %v138 = vld [vmem:[#allocation6 + $0x10] sm:$0xff]
    %v139 = vld [vmem:[#allocation6 + $0x18] sm:$0xff]
    %v140 = vld [vmem:[#allocation6 + $0x20] sm:$0xff]
    %v141 = vld [vmem:[#allocation6 + $0x28] sm:$0xff]
    %v142 = vld [vmem:[#allocation6 + $0x30] sm:$0xff]
    %v143 = vld [vmem:[#allocation6 + $0x38] sm:$0xff]
    %v144 = vld [vmem:[#allocation6 + $0x40] sm:$0xff]
    %v145 = vld [vmem:[#allocation6 + $0x48] sm:$0xff]
    %v146 = vld [vmem:[#allocation6 + $0x50] sm:$0xff]
    %v147 = vld [vmem:[#allocation6 + $0x58] sm:$0xff]
    %v148 = vld [vmem:[#allocation6 + $0x60] sm:$0xff]
    %v149 = vld [vmem:[#allocation6 + $0x68] sm:$0xff]
    %v150 = vld [vmem:[#allocation6 + $0x70] sm:$0xff]
    %v151 = vld [vmem:[#allocation6 + $0x78] sm:$0xff]
    %v152 = vld [vmem:[#allocation6 + $0x80] sm:$0xff]
    %v153 = vld [vmem:[#allocation6 + $0x88] sm:$0xff]
    %v154 = vld [vmem:[#allocation6 + $0x90] sm:$0xff]
    %v155 = vld [vmem:[#allocation6 + $0x98] sm:$0xff]
    %v156 = vld [vmem:[#allocation6 + $0xa0] sm:$0xff]
    %v157 = vld [vmem:[#allocation6 + $0xa8] sm:$0xff]
    %v158 = vld [vmem:[#allocation6 + $0xb0] sm:$0xff]
    %v159 = vld [vmem:[#allocation6 + $0xb8] sm:$0xff]
    %v160 = vld [vmem:[#allocation6 + $0xc0] sm:$0xff]
    %v161 = vld [vmem:[#allocation6 + $0xc8] sm:$0xff]
    %v162 = vld [vmem:[#allocation6 + $0xd0] sm:$0xff]
    %v163 = vld [vmem:[#allocation6 + $0xd8] sm:$0xff]
    %v164 = vld [vmem:[#allocation6 + $0xe0] sm:$0xff]
    %v165 = vld [vmem:[#allocation6 + $0xe8] sm:$0xff]
    %v166 = vld [vmem:[#allocation6 + $0xf0] sm:$0xff]
    %v167 = vld [vmem:[#allocation6 + $0xf8] sm:$0xff]
    %v176 = vunpack.c.l.b16 %v128
    %v177 = vunpack.c.l.b16 %v129
    %v178 = vunpack.c.l.b16 %v130
    %v179 = vunpack.c.l.b16 %v131
    %v180 = vunpack.c.l.b16 %v132
    %v181 = vunpack.c.l.b16 %v133
    %v182 = vunpack.c.l.b16 %v134
    %v183 = vunpack.c.l.b16 %v135
    %v184 = vpack.c.b16 %v177, %v176
    %v185 = vpack.c.b16 %v179, %v178
    %v186 = vpack.c.b16 %v181, %v180
    %v187 = vpack.c.b16 %v183, %v182
    %v224 = vunpack.c.l.b16 %v136
    %v225 = vunpack.c.h.b16 %v136
    %v226 = vunpack.c.l.b16 %v137
    %v227 = vunpack.c.h.b16 %v137
    %v228 = vunpack.c.l.b16 %v138
    %v229 = vunpack.c.h.b16 %v138
    %v230 = vunpack.c.l.b16 %v139
    %v231 = vunpack.c.h.b16 %v139
    %v232 = vunpack.c.l.b16 %v140
    %v233 = vunpack.c.h.b16 %v140
    %v234 = vunpack.c.l.b16 %v141
    %v235 = vunpack.c.h.b16 %v141
    %v236 = vunpack.c.l.b16 %v142
    %v237 = vunpack.c.h.b16 %v142
    %v238 = vunpack.c.l.b16 %v143
    %v239 = vunpack.c.h.b16 %v143
    %v240 = vunpack.c.l.b16 %v144
    %v241 = vunpack.c.h.b16 %v144
    %v242 = vunpack.c.l.b16 %v145
    %v243 = vunpack.c.h.b16 %v145
    %v244 = vunpack.c.l.b16 %v146
    %v245 = vunpack.c.h.b16 %v146
    %v246 = vunpack.c.l.b16 %v147
    %v247 = vunpack.c.h.b16 %v147
    %v248 = vunpack.c.l.b16 %v148
    %v249 = vunpack.c.h.b16 %v148
    %v250 = vunpack.c.l.b16 %v149
    %v251 = vunpack.c.h.b16 %v149
    %v252 = vunpack.c.l.b16 %v150
    %v253 = vunpack.c.h.b16 %v150
    %v254 = vunpack.c.l.b16 %v151
    %v255 = vunpack.c.h.b16 %v151
    %v256 = vunpack.c.l.b16 %v152
    %v257 = vunpack.c.h.b16 %v152
    %v258 = vunpack.c.l.b16 %v153
    %v259 = vunpack.c.h.b16 %v153
    %v260 = vunpack.c.l.b16 %v154
    %v261 = vunpack.c.h.b16 %v154
    %v262 = vunpack.c.l.b16 %v155
    %v263 = vunpack.c.h.b16 %v155
    %v264 = vunpack.c.l.b16 %v156
    %v265 = vunpack.c.h.b16 %v156
    %v266 = vunpack.c.l.b16 %v157
    %v267 = vunpack.c.h.b16 %v157
    %v268 = vunpack.c.l.b16 %v158
    %v269 = vunpack.c.h.b16 %v158
    %v270 = vunpack.c.l.b16 %v159
    %v271 = vunpack.c.h.b16 %v159
    %v272 = vunpack.c.l.b16 %v160
    %v273 = vunpack.c.h.b16 %v160
    %v274 = vunpack.c.l.b16 %v161
    %v275 = vunpack.c.h.b16 %v161
    %v276 = vunpack.c.l.b16 %v162
    %v277 = vunpack.c.h.b16 %v162
    %v278 = vunpack.c.l.b16 %v163
    %v279 = vunpack.c.h.b16 %v163
    %v280 = vunpack.c.l.b16 %v164
    %v281 = vunpack.c.h.b16 %v164
    %v282 = vunpack.c.l.b16 %v165
    %v283 = vunpack.c.h.b16 %v165
    %v284 = vunpack.c.l.b16 %v166
    %v285 = vunpack.c.h.b16 %v166
    %v286 = vunpack.c.l.b16 %v167
    %v287 = vunpack.c.h.b16 %v167
    %v288 = vpack.c.b16 %v228, %v224
    %v289 = vpack.c.b16 %v229, %v225
    %v290 = vpack.c.b16 %v230, %v226
    %v291 = vpack.c.b16 %v231, %v227
    %v292 = vpack.c.b16 %v236, %v232
    %v293 = vpack.c.b16 %v237, %v233
    %v294 = vpack.c.b16 %v238, %v234
    %v295 = vpack.c.b16 %v239, %v235
    %v296 = vpack.c.b16 %v244, %v240
    %v297 = vpack.c.b16 %v245, %v241
    %v298 = vpack.c.b16 %v246, %v242
    %v299 = vpack.c.b16 %v247, %v243
    %v300 = vpack.c.b16 %v252, %v248
    %v301 = vpack.c.b16 %v253, %v249
    %v302 = vpack.c.b16 %v254, %v250
    %v303 = vpack.c.b16 %v255, %v251
    %v304 = vpack.c.b16 %v260, %v256
    %v305 = vpack.c.b16 %v261, %v257
    %v306 = vpack.c.b16 %v262, %v258
    %v307 = vpack.c.b16 %v263, %v259
    %v308 = vpack.c.b16 %v268, %v264
    %v309 = vpack.c.b16 %v269, %v265
    %v310 = vpack.c.b16 %v270, %v266
    %v311 = vpack.c.b16 %v271, %v267
    %v312 = vpack.c.b16 %v276, %v272
    %v313 = vpack.c.b16 %v277, %v273
    %v314 = vpack.c.b16 %v278, %v274
    %v315 = vpack.c.b16 %v279, %v275
    %v316 = vpack.c.b16 %v284, %v280
    %v317 = vpack.c.b16 %v285, %v281
    %v318 = vpack.c.b16 %v286, %v282
    %v319 = vpack.c.b16 %v287, %v283
    %352 = vmatpush.bf16.msra.mxu0 %v316
    %353 = vmatpush.bf16.msra.mxu0 %v312
    %354 = vmatpush.bf16.msra.mxu0 %v308
    %355 = vmatpush.bf16.msra.mxu0 %v304
    %356 = vmatpush.bf16.msra.mxu0 %v300
    %357 = vmatpush.bf16.msra.mxu0 %v296
    %358 = vmatpush.bf16.msra.mxu0 %v292
    %359 = vmatpush.bf16.msra.mxu0 %v288
    %360 = vmatmul.bf16.gmra.mxu0 %v184
    %v361 = vpop.f32.mrf.mxu0
    %v362 = vadd.f32 0.0, %v361
    %v363 = vpop.f32.mrf.mxu0
    %v364 = vadd.f32 0.0, %v363
    %365 = vmatmul.bf16.gmra.mxu0 %v185
    %v366 = vpop.f32.mrf.mxu0
    %v367 = vadd.f32 0.0, %v366
    %v368 = vpop.f32.mrf.mxu0
    %v369 = vadd.f32 0.0, %v368
    %370 = vmatmul.bf16.gmra.mxu0 %v186
    %v371 = vpop.f32.mrf.mxu0
    %v372 = vadd.f32 0.0, %v371
    %v373 = vpop.f32.mrf.mxu0
    %v374 = vadd.f32 0.0, %v373
    %375 = vmatmul.bf16.gmra.mxu0 %v187
    %v376 = vpop.f32.mrf.mxu0
    %v377 = vadd.f32 0.0, %v376
    %v378 = vpop.f32.mrf.mxu0
    %v379 = vadd.f32 0.0, %v378
    %380 = vdwg.mxu0
    %381 = vmatpush.bf16.msra.mxu0 %v317
    %382 = vmatpush.bf16.msra.mxu0 %v313
    %383 = vmatpush.bf16.msra.mxu0 %v309
    %384 = vmatpush.bf16.msra.mxu0 %v305
    %385 = vmatpush.bf16.msra.mxu0 %v301
    %386 = vmatpush.bf16.msra.mxu0 %v297
    %387 = vmatpush.bf16.msra.mxu0 %v293
    %388 = vmatpush.bf16.msra.mxu0 %v289
    %389 = vmatmul.bf16.gmra.mxu0 %v184
    %v390 = vpop.f32.mrf.mxu0
    %v391 = vadd.f32 0.0, %v390
    %v392 = vpop.f32.mrf.mxu0
    %v393 = vadd.f32 0.0, %v392
    %394 = vmatmul.bf16.gmra.mxu0 %v185
    %v395 = vpop.f32.mrf.mxu0
    %v396 = vadd.f32 0.0, %v395
    %v397 = vpop.f32.mrf.mxu0
    %v398 = vadd.f32 0.0, %v397
    %399 = vmatmul.bf16.gmra.mxu0 %v186
    %v400 = vpop.f32.mrf.mxu0
    %v401 = vadd.f32 0.0, %v400
    %v402 = vpop.f32.mrf.mxu0
    %v403 = vadd.f32 0.0, %v402
    %404 = vmatmul.bf16.gmra.mxu0 %v187
    %v405 = vpop.f32.mrf.mxu0
    %v406 = vadd.f32 0.0, %v405
    %v407 = vpop.f32.mrf.mxu0
    %v408 = vadd.f32 0.0, %v407
    %409 = vdwg.mxu0
    %410 = vmatpush.bf16.msra.mxu0 %v318
    %411 = vmatpush.bf16.msra.mxu0 %v314
    %412 = vmatpush.bf16.msra.mxu0 %v310
    %413 = vmatpush.bf16.msra.mxu0 %v306
    %414 = vmatpush.bf16.msra.mxu0 %v302
    %415 = vmatpush.bf16.msra.mxu0 %v298
    %416 = vmatpush.bf16.msra.mxu0 %v294
    %417 = vmatpush.bf16.msra.mxu0 %v290
    %418 = vmatmul.bf16.gmra.mxu0 %v184
    %v419 = vpop.f32.mrf.mxu0
    %v420 = vadd.f32 0.0, %v419
    %v421 = vpop.f32.mrf.mxu0
    %v422 = vadd.f32 0.0, %v421
    %423 = vmatmul.bf16.gmra.mxu0 %v185
    %v424 = vpop.f32.mrf.mxu0
    %v425 = vadd.f32 0.0, %v424
    %v426 = vpop.f32.mrf.mxu0
    %v427 = vadd.f32 0.0, %v426
    %428 = vmatmul.bf16.gmra.mxu0 %v186
    %v429 = vpop.f32.mrf.mxu0
    %v430 = vadd.f32 0.0, %v429
    %v431 = vpop.f32.mrf.mxu0
    %v432 = vadd.f32 0.0, %v431
    %433 = vmatmul.bf16.gmra.mxu0 %v187
    %v434 = vpop.f32.mrf.mxu0
    %v435 = vadd.f32 0.0, %v434
    %v436 = vpop.f32.mrf.mxu0
    %v437 = vadd.f32 0.0, %v436
    %438 = vdwg.mxu0
    %439 = vmatpush.bf16.msra.mxu0 %v319
    %440 = vmatpush.bf16.msra.mxu0 %v315
    %441 = vmatpush.bf16.msra.mxu0 %v311
    %442 = vmatpush.bf16.msra.mxu0 %v307
    %443 = vmatpush.bf16.msra.mxu0 %v303
    %444 = vmatpush.bf16.msra.mxu0 %v299
    %445 = vmatpush.bf16.msra.mxu0 %v295
    %446 = vmatpush.bf16.msra.mxu0 %v291
    %447 = vmatmul.bf16.gmra.mxu0 %v184
    %v448 = vpop.f32.mrf.mxu0
    %v449 = vadd.f32 0.0, %v448
    %v450 = vpop.f32.mrf.mxu0
    %v451 = vadd.f32 0.0, %v450
    %452 = vmatmul.bf16.gmra.mxu0 %v185
    %v453 = vpop.f32.mrf.mxu0
    %v454 = vadd.f32 0.0, %v453
    %v455 = vpop.f32.mrf.mxu0
    %v456 = vadd.f32 0.0, %v455
    %457 = vmatmul.bf16.gmra.mxu0 %v186
    %v458 = vpop.f32.mrf.mxu0
    %v459 = vadd.f32 0.0, %v458
    %v460 = vpop.f32.mrf.mxu0
    %v461 = vadd.f32 0.0, %v460
    %462 = vmatmul.bf16.gmra.mxu0 %v187
    %v463 = vpop.f32.mrf.mxu0
    %v464 = vadd.f32 0.0, %v463
    %v465 = vpop.f32.mrf.mxu0
    %v466 = vadd.f32 0.0, %v465
    %467 = vdwg.mxu0
    %v468 = vadd.f32 %v96, %v362
    %v469 = vadd.f32 %v97, %v391
    %v470 = vadd.f32 %v98, %v420
    %v471 = vadd.f32 %v99, %v449
    %v472 = vadd.f32 %v100, %v364
    %v473 = vadd.f32 %v101, %v393
    %v474 = vadd.f32 %v102, %v422
    %v475 = vadd.f32 %v103, %v451
    %v476 = vadd.f32 %v104, %v367
    %v477 = vadd.f32 %v105, %v396
    %v478 = vadd.f32 %v106, %v425
    %v479 = vadd.f32 %v107, %v454
    %v480 = vadd.f32 %v108, %v369
    %v481 = vadd.f32 %v109, %v398
    %v482 = vadd.f32 %v110, %v427
    %v483 = vadd.f32 %v111, %v456
    %v484 = vadd.f32 %v112, %v372
    %v485 = vadd.f32 %v113, %v401
    %v486 = vadd.f32 %v114, %v430
    %v487 = vadd.f32 %v115, %v459
    %v488 = vadd.f32 %v116, %v374
    %v489 = vadd.f32 %v117, %v403
    %v490 = vadd.f32 %v118, %v432
    %v491 = vadd.f32 %v119, %v461
    %v492 = vadd.f32 %v120, %v377
    %v493 = vadd.f32 %v121, %v406
    %v494 = vadd.f32 %v122, %v435
    %v495 = vadd.f32 %v123, %v464
    %v496 = vadd.f32 %v124, %v379
    %v497 = vadd.f32 %v125, %v408
    %v498 = vadd.f32 %v126, %v437
    %v499 = vadd.f32 %v127, %v466
    %500 = vst [vmem:[#allocation2] sm:$0xff] %v468
    %501 = vst [vmem:[#allocation2 + $0x8] sm:$0xff] %v469
    %502 = vst [vmem:[#allocation2 + $0x10] sm:$0xff] %v470
    %503 = vst [vmem:[#allocation2 + $0x18] sm:$0xff] %v471
    %504 = vst [vmem:[#allocation2 + $0x20] sm:$0xff] %v472
    %505 = vst [vmem:[#allocation2 + $0x28] sm:$0xff] %v473
    %506 = vst [vmem:[#allocation2 + $0x30] sm:$0xff] %v474
    %507 = vst [vmem:[#allocation2 + $0x38] sm:$0xff] %v475
    %508 = vst [vmem:[#allocation2 + $0x40] sm:$0xff] %v476
    %509 = vst [vmem:[#allocation2 + $0x48] sm:$0xff] %v477
    %510 = vst [vmem:[#allocation2 + $0x50] sm:$0xff] %v478
    %511 = vst [vmem:[#allocation2 + $0x58] sm:$0xff] %v479
    %512 = vst [vmem:[#allocation2 + $0x60] sm:$0xff] %v480
    %513 = vst [vmem:[#allocation2 + $0x68] sm:$0xff] %v481
    %514 = vst [vmem:[#allocation2 + $0x70] sm:$0xff] %v482
    %515 = vst [vmem:[#allocation2 + $0x78] sm:$0xff] %v483
    %516 = vst [vmem:[#allocation2 + $0x80] sm:$0xff] %v484
    %517 = vst [vmem:[#allocation2 + $0x88] sm:$0xff] %v485
    %518 = vst [vmem:[#allocation2 + $0x90] sm:$0xff] %v486
    %519 = vst [vmem:[#allocation2 + $0x98] sm:$0xff] %v487
    %520 = vst [vmem:[#allocation2 + $0xa0] sm:$0xff] %v488
    %521 = vst [vmem:[#allocation2 + $0xa8] sm:$0xff] %v489
    %522 = vst [vmem:[#allocation2 + $0xb0] sm:$0xff] %v490
    %523 = vst [vmem:[#allocation2 + $0xb8] sm:$0xff] %v491
    %524 = vst [vmem:[#allocation2 + $0xc0] sm:$0xff] %v492
    %525 = vst [vmem:[#allocation2 + $0xc8] sm:$0xff] %v493
    %526 = vst [vmem:[#allocation2 + $0xd0] sm:$0xff] %v494
    %527 = vst [vmem:[#allocation2 + $0xd8] sm:$0xff] %v495
    %528 = vst [vmem:[#allocation2 + $0xe0] sm:$0xff] %v496
    %529 = vst [vmem:[#allocation2 + $0xe8] sm:$0xff] %v497
    %530 = vst [vmem:[#allocation2 + $0xf0] sm:$0xff] %v498
    %531 = vst [vmem:[#allocation2 + $0xf8] sm:$0xff] %v499
    // Predicated region
    $region30: #{tpu_custom_call.1} parent=1 // pred_check
      %p532 = pneg %p60
    $region31: #{tpu_custom_call.1} parent=1 // pred_check_branch
      %534 = sbr.rel (%p532) target = $region33
    $region32: #{tpu_custom_call.1} parent=1 // pred_region
      %v535 = vld [vmem:[#allocation2] sm:$0xff]
      %v536 = vld [vmem:[#allocation2 + $0x8] sm:$0xff]
      %v537 = vld [vmem:[#allocation2 + $0x10] sm:$0xff]
      %v538 = vld [vmem:[#allocation2 + $0x18] sm:$0xff]
      %v539 = vld [vmem:[#allocation2 + $0x20] sm:$0xff]
      %v540 = vld [vmem:[#allocation2 + $0x28] sm:$0xff]
      %v541 = vld [vmem:[#allocation2 + $0x30] sm:$0xff]
      %v542 = vld [vmem:[#allocation2 + $0x38] sm:$0xff]
      %v543 = vld [vmem:[#allocation2 + $0x40] sm:$0xff]
      %v544 = vld [vmem:[#allocation2 + $0x48] sm:$0xff]
      %v545 = vld [vmem:[#allocation2 + $0x50] sm:$0xff]
      %v546 = vld [vmem:[#allocation2 + $0x58] sm:$0xff]
      %v547 = vld [vmem:[#allocation2 + $0x60] sm:$0xff]
      %v548 = vld [vmem:[#allocation2 + $0x68] sm:$0xff]
      %v549 = vld [vmem:[#allocation2 + $0x70] sm:$0xff]
      %v550 = vld [vmem:[#allocation2 + $0x78] sm:$0xff]
      %v551 = vld [vmem:[#allocation2 + $0x80] sm:$0xff]
      %v552 = vld [vmem:[#allocation2 + $0x88] sm:$0xff]
      %v553 = vld [vmem:[#allocation2 + $0x90] sm:$0xff]
      %v554 = vld [vmem:[#allocation2 + $0x98] sm:$0xff]
      %v555 = vld [vmem:[#allocation2 + $0xa0] sm:$0xff]
      %v556 = vld [vmem:[#allocation2 + $0xa8] sm:$0xff]
      %v557 = vld [vmem:[#allocation2 + $0xb0] sm:$0xff]
      %v558 = vld [vmem:[#allocation2 + $0xb8] sm:$0xff]
      %v559 = vld [vmem:[#allocation2 + $0xc0] sm:$0xff]
      %v560 = vld [vmem:[#allocation2 + $0xc8] sm:$0xff]
      %v561 = vld [vmem:[#allocation2 + $0xd0] sm:$0xff]
      %v562 = vld [vmem:[#allocation2 + $0xd8] sm:$0xff]
      %v563 = vld [vmem:[#allocation2 + $0xe0] sm:$0xff]
      %v564 = vld [vmem:[#allocation2 + $0xe8] sm:$0xff]
      %v565 = vld [vmem:[#allocation2 + $0xf0] sm:$0xff]
      %v566 = vld [vmem:[#allocation2 + $0xf8] sm:$0xff]
      %v567 = vld [vmem:[#allocation8] sm:$0xf]
      %v569 = vperm.slane %v567, 0
      %v570 = vperm.slane %v567, 1
      %v571 = vperm.slane %v567, 2
      %v572 = vperm.slane %v567, 3
      %v577 = vadd.f32 %v535, %v569
      %v578 = vadd.f32 %v536, %v570
      %v579 = vadd.f32 %v537, %v571
      %v580 = vadd.f32 %v538, %v572
      %v581 = vadd.f32 %v539, %v569
      %v582 = vadd.f32 %v540, %v570
      %v583 = vadd.f32 %v541, %v571
      %v584 = vadd.f32 %v542, %v572
      %v585 = vadd.f32 %v543, %v569
      %v586 = vadd.f32 %v544, %v570
      %v587 = vadd.f32 %v545, %v571
      %v588 = vadd.f32 %v546, %v572
      %v589 = vadd.f32 %v547, %v569
      %v590 = vadd.f32 %v548, %v570
      %v591 = vadd.f32 %v549, %v571
      %v592 = vadd.f32 %v550, %v572
      %v593 = vadd.f32 %v551, %v569
      %v594 = vadd.f32 %v552, %v570
      %v595 = vadd.f32 %v553, %v571
      %v596 = vadd.f32 %v554, %v572
      %v597 = vadd.f32 %v555, %v569
      %v598 = vadd.f32 %v556, %v570
      %v599 = vadd.f32 %v557, %v571
      %v600 = vadd.f32 %v558, %v572
      %v601 = vadd.f32 %v559, %v569
      %v602 = vadd.f32 %v560, %v570
      %v603 = vadd.f32 %v561, %v571
      %v604 = vadd.f32 %v562, %v572
      %v605 = vadd.f32 %v563, %v569
      %v606 = vadd.f32 %v564, %v570
      %v607 = vadd.f32 %v565, %v571
      %v608 = vadd.f32 %v566, %v572
      %v609 = vpack.c.bf16 %v578, %v577
      %v610 = vpack.c.bf16 %v580, %v579
      %v611 = vpack.c.bf16 %v582, %v581
      %v612 = vpack.c.bf16 %v584, %v583
      %v613 = vpack.c.bf16 %v586, %v585
      %v614 = vpack.c.bf16 %v588, %v587
      %v615 = vpack.c.bf16 %v590, %v589
      %v616 = vpack.c.bf16 %v592, %v591
      %v617 = vpack.c.bf16 %v594, %v593
      %v618 = vpack.c.bf16 %v596, %v595
      %v619 = vpack.c.bf16 %v598, %v597
      %v620 = vpack.c.bf16 %v600, %v599
      %v621 = vpack.c.bf16 %v602, %v601
      %v622 = vpack.c.bf16 %v604, %v603
      %v623 = vpack.c.bf16 %v606, %v605
      %v624 = vpack.c.bf16 %v608, %v607
      %625 = vst [vmem:[#allocation9] sm:$0xff] %v609
      %626 = vst [vmem:[#allocation9 + $0x8] sm:$0xff] %v610
      %627 = vst [vmem:[#allocation9 + $0x10] sm:$0xff] %v611
      %628 = vst [vmem:[#allocation9 + $0x18] sm:$0xff] %v612
      %629 = vst [vmem:[#allocation9 + $0x20] sm:$0xff] %v613
      %630 = vst [vmem:[#allocation9 + $0x28] sm:$0xff] %v614
      %631 = vst [vmem:[#allocation9 + $0x30] sm:$0xff] %v615
      %632 = vst [vmem:[#allocation9 + $0x38] sm:$0xff] %v616
      %633 = vst [vmem:[#allocation9 + $0x40] sm:$0xff] %v617
      %634 = vst [vmem:[#allocation9 + $0x48] sm:$0xff] %v618
      %635 = vst [vmem:[#allocation9 + $0x50] sm:$0xff] %v619
      %636 = vst [vmem:[#allocation9 + $0x58] sm:$0xff] %v620
      %637 = vst [vmem:[#allocation9 + $0x60] sm:$0xff] %v621
      %638 = vst [vmem:[#allocation9 + $0x68] sm:$0xff] %v622
      %639 = vst [vmem:[#allocation9 + $0x70] sm:$0xff] %v623
      %640 = vst [vmem:[#allocation9 + $0x78] sm:$0xff] %v624
    $region33: #{tpu_custom_call.1} parent=1 // pred_fallthru
      _
    // Predicated region
    $region34: #{tpu_custom_call.1} parent=1 // pred_check
      _
    $region35: #{tpu_custom_call.1} parent=1 // pred_check_branch
      %642 = sbr.rel (0) target = $region37
    $region36: #{tpu_custom_call.1} parent=1 // pred_region
      %644 = vsyncadd [#allocation5], 0
      %s645 = sshll.u32 [#allocation9], 4
      %s646 = int_to_ptr.vmem [resolvable:$true] %s645
      %s647 = sshll.u32 %s3, 4
      %s648 = int_to_ptr.hbm [resolvable:$true] %s647
      %653 = dma.vmem_to_hbm [thread:$0]  %s646, 2048, %s648, [#allocation5], 256, 256, 16
    $region37: #{tpu_custom_call.1} parent=1 // pred_fallthru
      _
    // Predicated region
    $region38: #{tpu_custom_call.1} parent=1 // pred_check
      _
    $region39: #{tpu_custom_call.1} parent=1 // pred_check_branch
      %655 = sbr.rel (0) target = $region41
    $region40: #{tpu_custom_call.1} parent=1 // pred_region
      %657 = dma.done [#allocation5], 2048
    $region41: #{tpu_custom_call.1} parent=1 // pred_fallthru
      _
    %658 = vsyncpa [#allocation4], 1
    %659 = vsyncpa [#allocation7], 1
    %660 = vsyncpa [#allocation5], 1

</llo_original>
